<compile_context>
chip_gen: v5e
topology: v5e:2x2
jax: 0.10.0
libtpu: 0.0.40
codegen_flags: <defaults>
</compile_context>

<pallas_src>
import functools

import jax
import jax.numpy as jnp
from jax import lax
from jax.experimental import pallas as pl
from jax.experimental.pallas import tpu as pltpu

LANES = 128
SUBLANES = 8
VREG_ELEMS = SUBLANES * LANES  # 1024


def _num_tensorcores():
    """TensorCores per chip (2 on v7x-style 2-TC chips, 1 on v5e/v6e).

    Best-effort detection; a wrong answer only costs at most one extra
    fully-skipped tile of DMA per call, never correctness.
    """
    try:
        kind = jax.devices()[0].device_kind.lower()
        if "v7" in kind or "7x" in kind:
            return 2
    except Exception:
        pass
    for getter in (lambda: jax.devices()[0], pltpu.get_tpu_info):
        try:
            obj = getter()
        except Exception:
            continue
        for attr in ("num_cores", "core_count", "num_tensorcores"):
            val = getattr(obj, attr, None)
            if isinstance(val, int) and val >= 1:
                return min(2, val)
    return 1


def _multiple_loss_kernel(p_ref, t_ref, sse_ref, sae_ref, *, rows, tile_rows,
                          num_row_tiles, tiles_per_core, need_mask):
    """Accumulate (8,128)-granular SSE / SAE partials into resident outputs.

    sse_ref / sae_ref blocks are (1, 8, 128) f32 accumulators (constant block
    index along the 'arbitrary' tile axis -> resident across the reduction).
    """
    c = pl.program_id(0)
    i = pl.program_id(1)

    @pl.when(i == 0)
    def _():
        sse_ref[...] = jnp.zeros_like(sse_ref)
        sae_ref[...] = jnp.zeros_like(sae_ref)

    t8 = tile_rows // SUBLANES

    def accum(valid_mask):
        d = p_ref[...].astype(jnp.float32) - t_ref[...].astype(jnp.float32)
        sq = d * d
        ab = jnp.abs(d)
        if valid_mask is not None:
            sq = jnp.where(valid_mask, sq, 0.0)
            ab = jnp.where(valid_mask, ab, 0.0)
        # Reduce only across whole vregs (pure element-wise VALU adds; no XLU
        # sublane/lane reduce, no concatenate, no sub-vreg RMW). Final 8x128
        # -> scalar reduce is done once in the wrapper.
        sse_ref[...] += sq.reshape(t8, SUBLANES, LANES).sum(axis=0)[None, :, :]
        sae_ref[...] += ab.reshape(t8, SUBLANES, LANES).sum(axis=0)[None, :, :]

    if not need_mask:
        # Every tile is real and full: plain accumulate, no iota/select work.
        accum(None)
    else:
        vt = c * tiles_per_core + i  # virtual tile index

        @pl.when(vt < num_row_tiles - 1)
        def _():
            accum(None)

        @pl.when(vt == num_row_tiles - 1)
        def _():
            # Only the single (possibly ragged) last real tile pays for the
            # iota + compare + selects.
            gr = vt * tile_rows + lax.broadcasted_iota(
                jnp.int32, (tile_rows, LANES), 0)
            accum(gr < rows)

        # vt >= num_row_tiles: clamped duplicate tile -> contributes nothing.


def multiple_loss(predict, target, weights=(0.5, 0.5), *,
                  tile_bytes=2 * 1024 * 1024):
    """Weighted sum of MSE and L1 losses (mean reduction) via a Pallas kernel."""
    assert predict.shape == target.shape
    n_elems = predict.size
    w = tuple(float(x) for x in weights)
    itemsize = jnp.dtype(predict.dtype).itemsize

    pf = predict.reshape(-1)   # free (bitcast) for contiguous inputs
    tf = target.reshape(-1)

    if n_elems % LANES == 0 and n_elems >= VREG_ELEMS:
        rows = n_elems // LANES
    else:
        # TODO(synk): sub-lane-aligned / tiny sizes still pay one HBM copy
        # here; a fully copy-free path would need memory_space=pl.ANY + manual
        # DMA. Zero padding is loss-neutral (mean divides by true n_elems).
        padded = max(VREG_ELEMS, -(-n_elems // VREG_ELEMS) * VREG_ELEMS)
        pf = jnp.pad(pf, (0, padded - n_elems))
        tf = jnp.pad(tf, (0, padded - n_elems))
        rows = padded // LANES

    p2 = pf.reshape(rows, LANES)
    t2 = tf.reshape(rows, LANES)

    num_cores = _num_tensorcores()

    # Dtype-aware tile: ~tile_bytes per input buffer -> 2 inputs x 2 buffers
    # = 4 * tile_bytes of pipelined VMEM (8 MiB at the 2 MiB default), safe on
    # v5e/v6e/v7x default scoped limits. Raise tile_bytes only together with
    # pltpu.CompilerParams(vmem_limit_bytes=...).
    budget_rows = max(SUBLANES,
                      (tile_bytes // (LANES * itemsize)) // SUBLANES * SUBLANES)
    tile_rows = min(budget_rows, (rows // SUBLANES) * SUBLANES)
    num_row_tiles = -(-rows // tile_rows)
    tiles_per_core = -(-num_row_tiles // num_cores)
    grid = (num_cores, tiles_per_core)
    need_mask = (num_cores * tiles_per_core * tile_rows) != rows

    if need_mask:
        # Clamp virtual tiles past the real extent onto the last real tile
        # (their contribution is skipped inside the kernel).
        def in_map(c, i):
            return (jnp.minimum(c * tiles_per_core + i, num_row_tiles - 1), 0)
    else:
        def in_map(c, i):
            return (c * tiles_per_core + i, 0)

    kernel = functools.partial(
        _multiple_loss_kernel, rows=rows, tile_rows=tile_rows,
        num_row_tiles=num_row_tiles, tiles_per_core=tiles_per_core,
        need_mask=need_mask)

    cost = pl.CostEstimate(
        flops=5 * n_elems,
        transcendentals=0,
        bytes_accessed=2 * n_elems * itemsize
        + 2 * num_cores * SUBLANES * LANES * 4)

    sse_p, sae_p = pl.pallas_call(
        kernel,
        out_shape=(
            jax.ShapeDtypeStruct((num_cores, SUBLANES, LANES), jnp.float32),
            jax.ShapeDtypeStruct((num_cores, SUBLANES, LANES), jnp.float32),
        ),
        grid=grid,
        in_specs=[
            pl.BlockSpec((tile_rows, LANES), in_map),
            pl.BlockSpec((tile_rows, LANES), in_map),
        ],
        out_specs=(
            pl.BlockSpec((1, SUBLANES, LANES), lambda c, i: (c, 0, 0)),
            pl.BlockSpec((1, SUBLANES, LANES), lambda c, i: (c, 0, 0)),
        ),
        compiler_params=pltpu.CompilerParams(
            dimension_semantics=("parallel", "arbitrary")),
        cost_estimate=cost,
    )(p2, t2)

    # Final (tiny) cross-sublane/lane/core reduction + weighting in plain JAX.
    sse = jnp.sum(sse_p)
    sae = jnp.sum(sae_p)
    inv_n = 1.0 / float(n_elems)
    return w[0] * sse * inv_n + w[1] * sae * inv_n


def multiple_loss_ref(predict, target, weights=(0.5, 0.5)):
    p = predict.astype(jnp.float32)
    t = target.astype(jnp.float32)
    mse = jnp.mean((p - t) ** 2)
    mae = jnp.mean(jnp.abs(p - t))
    return weights[0] * mse + weights[1] * mae


if __name__ == "__main__":
    # Small NCHW prediction/target pair consistent with the module's usage.
    B, C, H, W = 2, 4, 16, 16
    key = jax.random.PRNGKey(0)
    kp, kt = jax.random.split(key)
    predict = jax.random.normal(kp, (B, C, H, W), dtype=jnp.float32)
    target = jax.random.normal(kt, (B, C, H, W), dtype=jnp.float32)

    # Default MultipleLoss weights: [1/len(losses)] * len(losses) with 2 losses.
    weights = (0.5, 0.5)

    out = multiple_loss(predict, target, weights)
    out = jax.block_until_ready(out)

    ref = multiple_loss_ref(predict, target, weights)
    assert jnp.allclose(out, ref, rtol=1e-5, atol=1e-5), (out, ref)
    print("KERNEL_OK")
</pallas_src>

<mosaic_0001>
module attributes {stable_mosaic.version = 11 : i64} {
  func.func @_multiple_loss_kernel(%arg0: i32, %arg1: i32, %arg2: memref<16x128xf32, #tpu.memory_space<vmem>>, %arg3: memref<16x128xf32, #tpu.memory_space<vmem>>, %arg4: memref<1x8x128xf32, #tpu.memory_space<vmem>>, %arg5: memref<1x8x128xf32, #tpu.memory_space<vmem>>) attributes {dimension_semantics = [#tpu.dimension_semantics<parallel>, #tpu.dimension_semantics<arbitrary>], iteration_bounds = array<i64: 1, 1>, scalar_prefetch = 0 : i64, scratch_operands = 0 : i64, tpu.core_type = #tpu.core_type<tc>, window_params = [{transform_indices = @transform_0, window_bounds = array<i64: 16, 128>}, {transform_indices = @transform_1, window_bounds = array<i64: 16, 128>}, {transform_indices = @transform_2, window_bounds = array<i64: 1, 8, 128>}, {transform_indices = @transform_3, window_bounds = array<i64: 1, 8, 128>}]} {
    %c0_i32 = arith.constant 0 : i32
    %0 = arith.cmpi eq, %arg1, %c0_i32 : i32
    %1 = arith.extui %0 : i1 to i32
    %c0_i32_0 = arith.constant 0 : i32
    %2 = arith.cmpi ne, %1, %c0_i32_0 : i32
    scf.if %2 {
      %cst_17 = arith.constant 0.000000e+00 : f32
      %20 = vector.broadcast %cst_17 : f32 to vector<1x8x128xf32>
      %c0_18 = arith.constant 0 : index
      %c0_19 = arith.constant 0 : index
      %c0_20 = arith.constant 0 : index
      %21 = vector.load %arg4[%c0_18, %c0_19, %c0_20] : memref<1x8x128xf32, #tpu.memory_space<vmem>>, vector<1x8x128xf32>
      tpu.vector_store %arg4[%c0_18, %c0_19, %c0_20], %20 {strides = array<i32>} : memref<1x8x128xf32, #tpu.memory_space<vmem>>, vector<1x8x128xf32>,
      %cst_21 = arith.constant 0.000000e+00 : f32
      %22 = vector.broadcast %cst_21 : f32 to vector<1x8x128xf32>
      %c0_22 = arith.constant 0 : index
      %c0_23 = arith.constant 0 : index
      %c0_24 = arith.constant 0 : index
      %23 = vector.load %arg5[%c0_22, %c0_23, %c0_24] : memref<1x8x128xf32, #tpu.memory_space<vmem>>, vector<1x8x128xf32>
      tpu.vector_store %arg5[%c0_22, %c0_23, %c0_24], %22 {strides = array<i32>} : memref<1x8x128xf32, #tpu.memory_space<vmem>>, vector<1x8x128xf32>,
    } else {
    }
    %c0 = arith.constant 0 : index
    %c0_1 = arith.constant 0 : index
    %3 = vector.load %arg2[%c0, %c0_1] : memref<16x128xf32, #tpu.memory_space<vmem>>, vector<16x128xf32>
    %c0_2 = arith.constant 0 : index
    %c0_3 = arith.constant 0 : index
    %4 = vector.load %arg3[%c0_2, %c0_3] : memref<16x128xf32, #tpu.memory_space<vmem>>, vector<16x128xf32>
    %5 = arith.subf %3, %4 : vector<16x128xf32>
    %6 = arith.mulf %5, %5 : vector<16x128xf32>
    %7 = math.absf %5 : vector<16x128xf32>
    %c0_4 = arith.constant 0 : index
    %c0_5 = arith.constant 0 : index
    %c0_6 = arith.constant 0 : index
    %8 = vector.load %arg4[%c0_4, %c0_5, %c0_6] : memref<1x8x128xf32, #tpu.memory_space<vmem>>, vector<1x8x128xf32>
    %9 = vector.shape_cast %6 : vector<16x128xf32> to vector<2x8x128xf32>
    %cst = arith.constant dense<0.000000e+00> : vector<8x128xf32>
    %10 = vector.multi_reduction <add>, %9, %cst [0] : vector<2x8x128xf32> to vector<8x128xf32>
    %11 = vector.shape_cast %10 : vector<8x128xf32> to vector<1x8x128xf32>
    %12 = arith.addf %8, %11 : vector<1x8x128xf32>
    %c0_7 = arith.constant 0 : index
    %c0_8 = arith.constant 0 : index
    %c0_9 = arith.constant 0 : index
    %13 = vector.load %arg4[%c0_7, %c0_8, %c0_9] : memref<1x8x128xf32, #tpu.memory_space<vmem>>, vector<1x8x128xf32>
    tpu.vector_store %arg4[%c0_7, %c0_8, %c0_9], %12 {strides = array<i32>} : memref<1x8x128xf32, #tpu.memory_space<vmem>>, vector<1x8x128xf32>,
    %c0_10 = arith.constant 0 : index
    %c0_11 = arith.constant 0 : index
    %c0_12 = arith.constant 0 : index
    %14 = vector.load %arg5[%c0_10, %c0_11, %c0_12] : memref<1x8x128xf32, #tpu.memory_space<vmem>>, vector<1x8x128xf32>
    %15 = vector.shape_cast %7 : vector<16x128xf32> to vector<2x8x128xf32>
    %cst_13 = arith.constant dense<0.000000e+00> : vector<8x128xf32>
    %16 = vector.multi_reduction <add>, %15, %cst_13 [0] : vector<2x8x128xf32> to vector<8x128xf32>
    %17 = vector.shape_cast %16 : vector<8x128xf32> to vector<1x8x128xf32>
    %18 = arith.addf %14, %17 : vector<1x8x128xf32>
    %c0_14 = arith.constant 0 : index
    %c0_15 = arith.constant 0 : index
    %c0_16 = arith.constant 0 : index
    %19 = vector.load %arg5[%c0_14, %c0_15, %c0_16] : memref<1x8x128xf32, #tpu.memory_space<vmem>>, vector<1x8x128xf32>
    tpu.vector_store %arg5[%c0_14, %c0_15, %c0_16], %18 {strides = array<i32>} : memref<1x8x128xf32, #tpu.memory_space<vmem>>, vector<1x8x128xf32>,
    return
  }
  func.func @transform_0(%arg0: i32, %arg1: i32) -> (i32, i32) {
    %c1_i32 = arith.constant 1 : i32
    %0 = arith.muli %arg0, %c1_i32 : i32
    %1 = arith.addi %0, %arg1 : i32
    %c0_i32 = arith.constant 0 : i32
    %c0_i32_0 = arith.constant 0 : i32
    return %1, %c0_i32 : i32, i32
  }
  func.func @transform_1(%arg0: i32, %arg1: i32) -> (i32, i32) {
    %c1_i32 = arith.constant 1 : i32
    %0 = arith.muli %arg0, %c1_i32 : i32
    %1 = arith.addi %0, %arg1 : i32
    %c0_i32 = arith.constant 0 : i32
    %c0_i32_0 = arith.constant 0 : i32
    return %1, %c0_i32 : i32, i32
  }
  func.func @transform_2(%arg0: i32, %arg1: i32) -> (i32, i32, i32) {
    %c0_i32 = arith.constant 0 : i32
    %c0_i32_0 = arith.constant 0 : i32
    %c0_i32_1 = arith.constant 0 : i32
    return %arg0, %c0_i32, %c0_i32_0 : i32, i32, i32
  }
  func.func @transform_3(%arg0: i32, %arg1: i32) -> (i32, i32, i32) {
    %c0_i32 = arith.constant 0 : i32
    %c0_i32_0 = arith.constant 0 : i32
    %c0_i32_1 = arith.constant 0 : i32
    return %arg0, %c0_i32, %c0_i32_0 : i32, i32, i32
  }
}

</mosaic_0001>

<llo_original>
// kernel: tpu_custom_call.1
$region0: #{tpu_custom_call.1}
  #allocation0 [shape = 'u32[]', space=smem, size = 0x4, offset = 0x4, fixed_abs, tag = 'smem constant byte address 0x4 - core index']
  #allocation1 [shape = 'u32[72,128]{1,0:T(1,128)}', space=vmem, size = 0x9000, scoped, tag = 'internal scratch']
  %s0 = inlined_call_operand.hbm [shape: f32[16,128], index: 0, kind: input, shape index: {}]
  %s1 = inlined_call_operand.hbm [shape: f32[16,128], index: 1, kind: input, shape index: {}]
  %s2 = inlined_call_operand.hbm [shape: f32[1,8,128], index: 2, kind: output, shape index: {0}]
  %s3 = inlined_call_operand.hbm [shape: f32[1,8,128], index: 3, kind: output, shape index: {1}]
  %4 = xla_tuple %s2, %s3
  %s5 = sld [smem:[#allocation0]]
  $region38: #{tpu_custom_call.1} parent=0
    _
  %s7 = ssub.s32 1, %s5
  %s8 = scalar_select 0, %s7, %s5
  $region1: #{tpu_custom_call.1} parent=0
    #allocation2 [shape = 'u8[8192]{0}', space=vmem, size = 0x2000, scoped, tag = 'input window, operand 0, single buffered']
    #allocation3 [shape = 's32[1]{0}', space=sflag, size = 0x4, scoped, tag = 'scoped memory for tpu_custom_call.1']
    #allocation4 [shape = 's32[1]{0}', space=sflag, size = 0x4, scoped, tag = 'scoped memory for tpu_custom_call.1']
    #allocation5 [shape = 'u8[8192]{0}', space=vmem, size = 0x2000, scoped, tag = 'input window, operand 1, single buffered']
    #allocation6 [shape = 's32[1]{0}', space=sflag, size = 0x4, scoped, tag = 'scoped memory for tpu_custom_call.1']
    #allocation7 [shape = 'u8[4096]{0}', space=vmem, size = 0x1000, scoped, tag = 'output window, operand 0, single buffered']
    #allocation8 [shape = 'u8[4096]{0}', space=vmem, size = 0x1000, scoped, tag = 'output window, operand 1, single buffered']
    #allocation9 [shape = 's32[1]{0}', space=sflag, size = 0x4, scoped, tag = 'scoped memory for tpu_custom_call.1']
    %9 = vsyncpa [#allocation3], 0
    %10 = vsyncpa [#allocation6], 0
    %11 = vsyncpa [#allocation4], 0
    %12 = vsyncpa [#allocation9], 0
    // Predicated region
    $region2: #{tpu_custom_call.1} parent=1 // pred_check
      _
    $region3: #{tpu_custom_call.1} parent=1 // pred_check_branch
      %14 = sbr.rel (0) target = $region5
    $region4: #{tpu_custom_call.1} parent=1 // pred_region
      %s15 = sadd.s32 0, 0
      %s16 = smul.u32 2, %s15
      %18 = vsyncadd [#allocation3], 0
      %s19 = smul.addr %s16, 8
      %s20 = scalar_lea.hbm %s0, %s19
      %s21 = sshll.u32 %s20, 4
      %s22 = int_to_ptr.hbm [resolvable:$true] %s21
      %s23 = sshll.u32 [#allocation2], 4
      %s24 = int_to_ptr.vmem [resolvable:$true] %s23
      %29 = dma.hbm_to_vmem [thread:$0]  %s22, 256, %s24, [#allocation3], 128, 128, 8
    $region5: #{tpu_custom_call.1} parent=1 // pred_fallthru
      _
    // Predicated region
    $region6: #{tpu_custom_call.1} parent=1 // pred_check
      _
    $region7: #{tpu_custom_call.1} parent=1 // pred_check_branch
      %31 = sbr.rel (0) target = $region9
    $region8: #{tpu_custom_call.1} parent=1 // pred_region
      %s32 = sadd.s32 0, 0
      %s33 = smul.u32 2, %s32
      %35 = vsyncadd [#allocation6], 0
      %s36 = smul.addr %s33, 8
      %s37 = scalar_lea.hbm %s1, %s36
      %s38 = sshll.u32 %s37, 4
      %s39 = int_to_ptr.hbm [resolvable:$true] %s38
      %s40 = sshll.u32 [#allocation5], 4
      %s41 = int_to_ptr.vmem [resolvable:$true] %s40
      %46 = dma.hbm_to_vmem [thread:$0]  %s39, 256, %s41, [#allocation6], 128, 128, 8
    $region9: #{tpu_custom_call.1} parent=1 // pred_fallthru
      _
    // Predicated region
    $region10: #{tpu_custom_call.1} parent=1 // pred_check
      _
    $region11: #{tpu_custom_call.1} parent=1 // pred_check_branch
      %48 = sbr.rel (0) target = $region13
    $region12: #{tpu_custom_call.1} parent=1 // pred_region
      %50 = dma.done [#allocation3], 256
    $region13: #{tpu_custom_call.1} parent=1 // pred_fallthru
      _
    // Predicated region
    $region14: #{tpu_custom_call.1} parent=1 // pred_check
      _
    $region15: #{tpu_custom_call.1} parent=1 // pred_check_branch
      %52 = sbr.rel (0) target = $region17
    $region16: #{tpu_custom_call.1} parent=1 // pred_region
      %54 = dma.done [#allocation6], 256
    $region17: #{tpu_custom_call.1} parent=1 // pred_fallthru
      _
    %s55 = sadd.s32 0, 0
    %s56 = smul.u32 2, %s55
    %s57 = sadd.s32 0, 0
    %s58 = smul.u32 2, %s57
    %p59 = scmp.eq.s32.totalorder 0, 0
    // Predicated region
    $region18: #{tpu_custom_call.1} parent=1 // pred_check
      %p60 = pneg %p59
    $region19: #{tpu_custom_call.1} parent=1 // pred_check_branch
      %62 = sbr.rel (%p60) target = $region21
    $region20: #{tpu_custom_call.1} parent=1 // pred_region
      %63 = vst [vmem:[#allocation7] sm:$0xff] 0.0
      %64 = vst [vmem:[#allocation8] sm:$0xff] 0.0
    $region21: #{tpu_custom_call.1} parent=1 // pred_fallthru
      _
    %v65 = vld [vmem:[#allocation2] sm:$0xff]
    %v66 = vld [vmem:[#allocation2 + $0x8] sm:$0xff]
    %v67 = vld [vmem:[#allocation5] sm:$0xff]
    %v68 = vld [vmem:[#allocation5 + $0x8] sm:$0xff]
    %v69 = vsub.f32 %v65, %v67
    %v70 = vsub.f32 %v66, %v68
    %v71 = vmul.f32 %v69, %v69
    %v72 = vmul.f32 %v70, %v70
    %v73 = vand.u32 2147483647, %v69
    %v74 = vand.u32 2147483647, %v70
    %v75 = vld [vmem:[#allocation7] sm:$0xff]
    %v76 = vadd.f32 %v71, %v72
    %v77 = vadd.f32 %v75, %v76
    %78 = vst [vmem:[#allocation7] sm:$0xff] %v77
    %v79 = vld [vmem:[#allocation8] sm:$0xff]
    %v80 = vadd.f32 %v73, %v74
    %v81 = vadd.f32 %v79, %v80
    %82 = vst [vmem:[#allocation8] sm:$0xff] %v81
    // Predicated region
    $region22: #{tpu_custom_call.1} parent=1 // pred_check
      _
    $region23: #{tpu_custom_call.1} parent=1 // pred_check_branch
      %84 = sbr.rel (0) target = $region25
    $region24: #{tpu_custom_call.1} parent=1 // pred_region
      %86 = vsyncadd [#allocation4], 0
      %s88 = sshll.u32 [#allocation7], 4
      %s89 = int_to_ptr.vmem [resolvable:$true] %s88
      %s90 = sshll.u32 %s2, 4
      %s91 = int_to_ptr.hbm [resolvable:$true] %s90
      %93 = dma.vmem_to_hbm [thread:$0]  %s89, 128, %s91, [#allocation4]
    $region25: #{tpu_custom_call.1} parent=1 // pred_fallthru
      _
    // Predicated region
    $region26: #{tpu_custom_call.1} parent=1 // pred_check
      _
    $region27: #{tpu_custom_call.1} parent=1 // pred_check_branch
      %95 = sbr.rel (0) target = $region29
    $region28: #{tpu_custom_call.1} parent=1 // pred_region
      %97 = vsyncadd [#allocation9], 0
      %s99 = sshll.u32 [#allocation8], 4
      %s100 = int_to_ptr.vmem [resolvable:$true] %s99
      %s101 = sshll.u32 %s3, 4
      %s102 = int_to_ptr.hbm [resolvable:$true] %s101
      %104 = dma.vmem_to_hbm [thread:$0]  %s100, 128, %s102, [#allocation9]
    $region29: #{tpu_custom_call.1} parent=1 // pred_fallthru
      _
    // Predicated region
    $region30: #{tpu_custom_call.1} parent=1 // pred_check
      _
    $region31: #{tpu_custom_call.1} parent=1 // pred_check_branch
      %106 = sbr.rel (0) target = $region33
    $region32: #{tpu_custom_call.1} parent=1 // pred_region
      %108 = dma.done [#allocation4], 128
    $region33: #{tpu_custom_call.1} parent=1 // pred_fallthru
      _
    // Predicated region
    $region34: #{tpu_custom_call.1} parent=1 // pred_check
      _
    $region35: #{tpu_custom_call.1} parent=1 // pred_check_branch
      %110 = sbr.rel (0) target = $region37
    $region36: #{tpu_custom_call.1} parent=1 // pred_region
      %112 = dma.done [#allocation9], 128
    $region37: #{tpu_custom_call.1} parent=1 // pred_fallthru
      _
    %113 = vsyncpa [#allocation3], 1
    %114 = vsyncpa [#allocation6], 1
    %115 = vsyncpa [#allocation4], 1
    %116 = vsyncpa [#allocation9], 1

</llo_original>
